<compile_context>
chip_gen: v7x
topology: tpu7x:2x2x1
jax: 0.10.0
libtpu: 0.0.40
codegen_flags: <defaults>
</compile_context>

<pallas_src>
import jax
import jax.numpy as jnp
from jax.experimental import pallas as pl
from jax.experimental.pallas import tpu as pltpu


def _round_up(x, m):
    return (x + m - 1) // m * m


# ---------------------------------------------------------------------------
# One-time parameter preparation (padding, bf16 cast, contiguous W2 tiles)
# ---------------------------------------------------------------------------
def prepare_decoder_params(w1, b1, w2, b2, *, block_n=512):
    """w1: [z_dim, H]; b1: [H]; w2: [H, 784]; b2: [784] ([in, out] layout)."""
    Z, H = w1.shape
    O = w2.shape[1]

    Zp = _round_up(Z, 32)          # 20 -> 32
    Hp = _round_up(H, 128)         # 500 -> 512
    Op = _round_up(O, block_n)     # 784 -> 1024 (2 x 512-wide tiles)
    n_blocks = Op // block_n

    w1p = jnp.pad(w1, ((0, Zp - Z), (0, Hp - H))).astype(jnp.bfloat16)
    b1p = jnp.pad(b1, (0, Hp - H)).reshape(1, Hp)

    # Pre-reshape W2 so each column tile is a single contiguous HBM slab:
    # (Hp, Op) -> (n_blocks, Hp, block_n).
    w2p = jnp.pad(w2, ((0, Hp - H), (0, Op - O))).astype(jnp.bfloat16)
    w2p = w2p.reshape(Hp, n_blocks, block_n).transpose(1, 0, 2)
    b2p = jnp.pad(b2, (0, Op - O)).reshape(n_blocks, 1, block_n)

    meta = dict(Z=Z, Zp=Zp, H=H, Hp=Hp, O=O, Op=Op,
                block_n=block_n, n_blocks=n_blocks)
    return (w1p, b1p, w2p, b2p), meta


def prepare_encoder_params(w, b, wmu, bmu, wsig, bsig):
    """w: [784, H]; mu/sigma heads: [H, z_dim] ([in, out] layout)."""
    I, H = w.shape
    Z = wmu.shape[1]

    Ip = _round_up(I, 128)          # 784 -> 896
    Hp = _round_up(H, 128)          # 500 -> 512
    Zhp = _round_up(2 * Z, 128)     # fused mu||sigma head: 40 -> 128

    wp = jnp.pad(w, ((0, Ip - I), (0, Hp - H))).astype(jnp.bfloat16)
    bp = jnp.pad(b, (0, Hp - H)).reshape(1, Hp)

    whead = jnp.concatenate([wmu, wsig], axis=1)                  # (H, 2Z)
    wheadp = jnp.pad(whead, ((0, Hp - H), (0, Zhp - 2 * Z))).astype(jnp.bfloat16)
    bheadp = jnp.pad(jnp.concatenate([bmu, bsig]), (0, Zhp - 2 * Z)).reshape(1, Zhp)

    meta = dict(I=I, Ip=Ip, H=H, Hp=Hp, Z=Z, Zhp=Zhp)
    return (wp, bp, wheadp, bheadp), meta


# ---------------------------------------------------------------------------
# Decoder kernel: sigmoid(tanh(z @ W1 + b1) @ W2 + b2), tiled over output cols
# ---------------------------------------------------------------------------
def _decoder_kernel(z_ref, w1_ref, b1_ref, w2_ref, b2_ref, out_ref):
    # z_ref : (B, Zp) f32      w1_ref: (Zp, Hp) bf16       b1_ref: (1, Hp) f32
    # w2_ref: (1, Hp, TN) bf16 b2_ref: (1, 1, TN) f32      out_ref: (B, TN) f32
    # linear1 + tanh — recomputed per tile (only 2 tiles; z/W1 tiny & resident).
    h = jnp.dot(z_ref[...].astype(jnp.bfloat16), w1_ref[...],
                preferred_element_type=jnp.float32)
    h = jnp.tanh(h + b1_ref[...])
    # linear2 (one 512-wide, contiguous column tile) + sigmoid
    y = jnp.dot(h.astype(jnp.bfloat16), w2_ref[0],
                preferred_element_type=jnp.float32)
    out_ref[...] = jax.nn.sigmoid(y + b2_ref[0])


def decoder_forward(z, dec_prep, meta):
    """z: [B, z_dim]; dec_prep/meta from prepare_decoder_params."""
    w1p, b1p, w2p, b2p = dec_prep
    B, Z = z.shape
    Zp, Hp = meta["Zp"], meta["Hp"]
    O, Op = meta["O"], meta["Op"]
    block_n, n_blocks = meta["block_n"], meta["n_blocks"]

    zp = jnp.pad(z, ((0, 0), (0, Zp - Z)))

    cost = pl.CostEstimate(
        flops=2 * B * (Zp * Hp * n_blocks + Hp * Op),
        transcendentals=B * (Hp * n_blocks + Op),
        bytes_accessed=(zp.size * 4 + w1p.size * 2 + b1p.size * 4
                        + w2p.size * 2 + b2p.size * 4 + B * Op * 4),
    )

    out_p = pl.pallas_call(
        _decoder_kernel,
        out_shape=jax.ShapeDtypeStruct((B, Op), jnp.float32),
        grid=(n_blocks,),
        in_specs=[
            pl.BlockSpec((B, Zp), lambda i: (0, 0)),            # z   (replicated)
            pl.BlockSpec((Zp, Hp), lambda i: (0, 0)),           # W1  (replicated)
            pl.BlockSpec((1, Hp), lambda i: (0, 0)),            # b1  (replicated)
            pl.BlockSpec((1, Hp, block_n), lambda i: (i, 0, 0)),  # W2 tile (contiguous)
            pl.BlockSpec((1, 1, block_n), lambda i: (i, 0, 0)),   # b2 tile
        ],
        out_specs=pl.BlockSpec((B, block_n), lambda i: (0, i)),
        compiler_params=pltpu.CompilerParams(
            # Column tiles are independent -> megacore-shardable on v7x.
            dimension_semantics=("parallel",),
        ),
        cost_estimate=cost,
    )(zp, w1p, b1p, w2p, b2p)

    # TODO(synk): add a batch grid axis (TB=256 on v6e/v7x, 128 on v5e) if B
    # ever grows large; at B=8 the kernel is launch/DMA-bound by construction.
    return out_p[:, :O]


# ---------------------------------------------------------------------------
# Encoder kernel: h = tanh(x @ W + b); heads = h @ [Wmu||Wsig] + [bmu||bsig];
#                 mean = tanh(heads)[:, :Z]; std = sigmoid(heads)[:, Z:2Z]
# ---------------------------------------------------------------------------
def _encoder_kernel(x_ref, w_ref, b_ref, whead_ref, bhead_ref,
                    mean_ref, std_ref):
    h = jnp.tanh(jnp.dot(x_ref[...].astype(jnp.bfloat16), w_ref[...],
                         preferred_element_type=jnp.float32) + b_ref[...])
    heads = jnp.dot(h.astype(jnp.bfloat16), whead_ref[...],
                    preferred_element_type=jnp.float32) + bhead_ref[...]
    mean_ref[...] = jnp.tanh(heads)
    std_ref[...] = jax.nn.sigmoid(heads)


def encoder_forward(x, enc_prep, meta):
    """x: [B, 784]; enc_prep/meta from prepare_encoder_params."""
    wp, bp, wheadp, bheadp = enc_prep
    B, I = x.shape
    Ip, Zhp, Z = meta["Ip"], meta["Zhp"], meta["Z"]

    xp = jnp.pad(x, ((0, 0), (0, Ip - I)))

    # Everything fits comfortably in VMEM (~1.3 MiB total) -> single-block call.
    mean_p, std_p = pl.pallas_call(
        _encoder_kernel,
        out_shape=(jax.ShapeDtypeStruct((B, Zhp), jnp.float32),
                   jax.ShapeDtypeStruct((B, Zhp), jnp.float32)),
    )(xp, wp, bp, wheadp, bheadp)

    mean = mean_p[:, :Z]          # mu head occupies columns [0, Z)
    std = std_p[:, Z:2 * Z]       # sigma head occupies columns [Z, 2Z)
    return mean, std


# ---------------------------------------------------------------------------
# VAE forward (negative average ELBO) — thin JAX glue around the two kernels
# ---------------------------------------------------------------------------
def _elbo(x, mean, std, mean_g, z_dim):
    gen1 = jnp.sum(std, axis=1)
    gen2 = jnp.sum(mean * mean, axis=1)              # == diag(mean @ mean.T)
    gen3 = jnp.sum(jnp.log(std), axis=1)             # == log(prod(std)), stable form
    l_gen = 0.5 * (gen1 + gen2 - gen3 - z_dim)

    p_gx = jnp.zeros_like(mean_g)
    p_gx = jnp.where(x == 1, mean_g, p_gx)
    p_gx = jnp.where(x == 0, 1.0 - mean_g, p_gx)
    l_rec = -jnp.sum(jnp.log(p_gx), axis=1)

    return jnp.sum(l_gen + l_rec) / x.shape[0]


def vae_forward(x, enc_prep, enc_meta, dec_prep, dec_meta, eps, z_dim):
    """Matches VAE.forward; `eps` replaces the in-module np.random sampling."""
    mean, std = encoder_forward(x, enc_prep, enc_meta)
    z = std * eps + mean                              # reparameterisation
    mean_g = decoder_forward(z, dec_prep, dec_meta)
    return _elbo(x, mean, std, mean_g, z_dim)


# ---------------------------------------------------------------------------
# Pure-JAX references (same bf16-weight / f32-accumulation numerics)
# ---------------------------------------------------------------------------
def _decoder_ref(z, w1, b1, w2, b2):
    h = jnp.tanh(jnp.dot(z.astype(jnp.bfloat16), w1.astype(jnp.bfloat16),
                         preferred_element_type=jnp.float32) + b1)
    return jax.nn.sigmoid(jnp.dot(h.astype(jnp.bfloat16), w2.astype(jnp.bfloat16),
                                  preferred_element_type=jnp.float32) + b2)


def _encoder_ref(x, w, b, wmu, bmu, wsig, bsig):
    h = jnp.tanh(jnp.dot(x.astype(jnp.bfloat16), w.astype(jnp.bfloat16),
                         preferred_element_type=jnp.float32) + b)
    hb = h.astype(jnp.bfloat16)
    mean = jnp.tanh(jnp.dot(hb, wmu.astype(jnp.bfloat16),
                            preferred_element_type=jnp.float32) + bmu)
    std = jax.nn.sigmoid(jnp.dot(hb, wsig.astype(jnp.bfloat16),
                                 preferred_element_type=jnp.float32) + bsig)
    return mean, std


def _vae_ref(x, enc_params, dec_params, eps, z_dim):
    mean, std = _encoder_ref(x, *enc_params)
    z = std * eps + mean
    mean_g = _decoder_ref(z, *dec_params)
    return _elbo(x, mean, std, mean_g, z_dim)


# ---------------------------------------------------------------------------
# Parameter init (mimics nn.Linear default U[-1/sqrt(fan_in), +1/sqrt(fan_in)])
# ---------------------------------------------------------------------------
def _linear_init(key, fan_in, fan_out):
    kw, kb = jax.random.split(key)
    bound = 1.0 / jnp.sqrt(jnp.float32(fan_in))
    w = jax.random.uniform(kw, (fan_in, fan_out), jnp.float32, -bound, bound)
    b = jax.random.uniform(kb, (fan_out,), jnp.float32, -bound, bound)
    return w, b


def init_decoder_params(key, z_dim=20, hidden_dim=500, out_dim=784):
    k1, k2 = jax.random.split(key)
    w1, b1 = _linear_init(k1, z_dim, hidden_dim)
    w2, b2 = _linear_init(k2, hidden_dim, out_dim)
    return w1, b1, w2, b2


def init_encoder_params(key, in_dim=784, hidden_dim=500, z_dim=20):
    k1, k2, k3 = jax.random.split(key, 3)
    w, b = _linear_init(k1, in_dim, hidden_dim)
    wmu, bmu = _linear_init(k2, hidden_dim, z_dim)
    wsig, bsig = _linear_init(k3, hidden_dim, z_dim)
    return w, b, wmu, bmu, wsig, bsig


if __name__ == "__main__":
    key = jax.random.PRNGKey(0)
    k_enc, k_dec, k_x, k_z, k_eps = jax.random.split(key, 5)

    z_dim, hidden_dim, in_dim = 20, 500, 784
    batch = 8

    enc_params = init_encoder_params(k_enc, in_dim, hidden_dim, z_dim)
    dec_params = init_decoder_params(k_dec, z_dim, hidden_dim, in_dim)

    # One-time parameter prep (padding / bf16 cast / contiguous W2 tiles).
    enc_prep, enc_meta = prepare_encoder_params(*enc_params)
    dec_prep, dec_meta = prepare_decoder_params(*dec_params)
    enc_prep = jax.block_until_ready(enc_prep)
    dec_prep = jax.block_until_ready(dec_prep)

    # --- decoder kernel check (the hot path of VAE.forward / VAE.sample) ---
    z = jax.random.normal(k_z, (batch, z_dim), jnp.float32)
    dec_out = jax.block_until_ready(decoder_forward(z, dec_prep, dec_meta))
    dec_bf16_ref = _decoder_ref(z, *dec_params)
    dec_f32_ref = jax.nn.sigmoid(
        jnp.tanh(z @ dec_params[0] + dec_params[1]) @ dec_params[2] + dec_params[3])
    assert dec_out.shape == (batch, in_dim)
    assert jnp.allclose(dec_out, dec_bf16_ref, atol=2e-3), "decoder mismatch vs bf16 ref"
    assert jnp.allclose(dec_out, dec_f32_ref, atol=3e-2), "decoder mismatch vs f32 ref"

    # --- encoder kernel check --------------------------------------------
    x = (jax.random.uniform(k_x, (batch, in_dim)) < 0.3).astype(jnp.float32)
    enc_mean, enc_std = encoder_forward(x, enc_prep, enc_meta)
    ref_mean, ref_std = _encoder_ref(x, *enc_params)
    assert jnp.allclose(enc_mean, ref_mean, atol=2e-3), "encoder mean mismatch"
    assert jnp.allclose(enc_std, ref_std, atol=2e-3), "encoder std mismatch"

    # --- full VAE forward: negative average ELBO ---------------------------
    eps = jax.random.normal(k_eps, (z_dim,), jnp.float32)  # one vector shared over batch, as in sampleNormal()
    neg_elbo = jax.block_until_ready(
        vae_forward(x, enc_prep, enc_meta, dec_prep, dec_meta, eps, z_dim))
    neg_elbo_ref = _vae_ref(x, enc_params, dec_params, eps, z_dim)
    assert jnp.isfinite(neg_elbo), "non-finite ELBO"
    assert jnp.allclose(neg_elbo, neg_elbo_ref, rtol=1e-3, atol=1e-1), "ELBO mismatch"

    print("KERNEL_OK")
</pallas_src>

<mosaic_0001>
module attributes {stable_mosaic.version = 11 : i64} {
  func.func @_decoder_kernel(%arg0: i32, %arg1: memref<8x32xf32, #tpu.memory_space<vmem>>, %arg2: memref<32x512xbf16, #tpu.memory_space<vmem>>, %arg3: memref<1x512xf32, #tpu.memory_space<vmem>>, %arg4: memref<1x512x512xbf16, #tpu.memory_space<vmem>>, %arg5: memref<1x1x512xf32, #tpu.memory_space<vmem>>, %arg6: memref<8x512xf32, #tpu.memory_space<vmem>>) attributes {dimension_semantics = [#tpu.dimension_semantics<parallel>], iteration_bounds = array<i64: 2>, scalar_prefetch = 0 : i64, scratch_operands = 0 : i64, tpu.core_type = #tpu.core_type<tc>, window_params = [{pipeline_mode = #tpu.pipeline_mode<synchronous>, transform_indices = @transform_0, window_bounds = array<i64: 8, 32>}, {pipeline_mode = #tpu.pipeline_mode<synchronous>, transform_indices = @transform_1, window_bounds = array<i64: 32, 512>}, {pipeline_mode = #tpu.pipeline_mode<synchronous>, transform_indices = @transform_2, window_bounds = array<i64: 1, 512>}, {transform_indices = @transform_3, window_bounds = array<i64: 1, 512, 512>}, {transform_indices = @transform_4, window_bounds = array<i64: 1, 1, 512>}, {transform_indices = @transform_5, window_bounds = array<i64: 8, 512>}]} {
    %c0 = arith.constant 0 : index
    %c0_0 = arith.constant 0 : index
    %0 = vector.load %arg1[%c0, %c0_0] : memref<8x32xf32, #tpu.memory_space<vmem>>, vector<8x32xf32>
    %1 = arith.truncf %0 : vector<8x32xf32> to vector<8x32xbf16>
    %c0_1 = arith.constant 0 : index
    %c0_2 = arith.constant 0 : index
    %2 = vector.load %arg2[%c0_1, %c0_2] : memref<32x512xbf16, #tpu.memory_space<vmem>>, vector<32x512xbf16>
    %cst = arith.constant dense<0.000000e+00> : vector<8x512xf32>
    %3 = tpu.matmul %1, %2, %cst {dimension_numbers = #tpu.dot_dimension_numbers<[1], [0], [0], [1], [0, 0, 1, 1], [], []>} : vector<8x32xbf16>, vector<32x512xbf16>, vector<8x512xf32> -> vector<8x512xf32>
    %c0_3 = arith.constant 0 : index
    %c0_4 = arith.constant 0 : index
    %4 = vector.load %arg3[%c0_3, %c0_4] : memref<1x512xf32, #tpu.memory_space<vmem>>, vector<1x512xf32>
    %5 = vector.broadcast %4 : vector<1x512xf32> to vector<8x512xf32>
    %6 = arith.addf %3, %5 : vector<8x512xf32>
    %7 = math.tanh %6 : vector<8x512xf32>
    %8 = arith.truncf %7 : vector<8x512xf32> to vector<8x512xbf16>
    %c0_5 = arith.constant 0 : index
    %c0_6 = arith.constant 0 : index
    %c0_7 = arith.constant 0 : index
    %9 = vector.load %arg4[%c0_5, %c0_6, %c0_7] : memref<1x512x512xbf16, #tpu.memory_space<vmem>>, vector<1x512x512xbf16>
    %10 = vector.shape_cast %9 : vector<1x512x512xbf16> to vector<512x512xbf16>
    %cst_8 = arith.constant dense<0.000000e+00> : vector<8x512xf32>
    %11 = tpu.matmul %8, %10, %cst_8 {dimension_numbers = #tpu.dot_dimension_numbers<[1], [0], [0], [1], [0, 0, 1, 1], [], []>} : vector<8x512xbf16>, vector<512x512xbf16>, vector<8x512xf32> -> vector<8x512xf32>
    %c0_9 = arith.constant 0 : index
    %c0_10 = arith.constant 0 : index
    %c0_11 = arith.constant 0 : index
    %12 = vector.load %arg5[%c0_9, %c0_10, %c0_11] : memref<1x1x512xf32, #tpu.memory_space<vmem>>, vector<1x1x512xf32>
    %13 = vector.shape_cast %12 : vector<1x1x512xf32> to vector<1x512xf32>
    %14 = vector.broadcast %13 : vector<1x512xf32> to vector<8x512xf32>
    %15 = arith.addf %11, %14 : vector<8x512xf32>
    %16 = arith.negf %15 : vector<8x512xf32>
    %17 = math.exp %16 : vector<8x512xf32>
    %cst_12 = arith.constant 1.000000e+00 : f32
    %18 = vector.broadcast %cst_12 : f32 to vector<8x512xf32>
    %19 = arith.addf %18, %17 : vector<8x512xf32>
    %20 = arith.divf %18, %19 : vector<8x512xf32>
    %c0_13 = arith.constant 0 : index
    %c0_14 = arith.constant 0 : index
    %21 = vector.load %arg6[%c0_13, %c0_14] : memref<8x512xf32, #tpu.memory_space<vmem>>, vector<8x512xf32>
    tpu.vector_store %arg6[%c0_13, %c0_14], %20 {strides = array<i32>} : memref<8x512xf32, #tpu.memory_space<vmem>>, vector<8x512xf32>,
    return
  }
  func.func @transform_0(%arg0: i32) -> (i32, i32) {
    %c0_i32 = arith.constant 0 : i32
    %c0_i32_0 = arith.constant 0 : i32
    %c0_i32_1 = arith.constant 0 : i32
    return %c0_i32, %c0_i32_0 : i32, i32
  }
  func.func @transform_1(%arg0: i32) -> (i32, i32) {
    %c0_i32 = arith.constant 0 : i32
    %c0_i32_0 = arith.constant 0 : i32
    %c0_i32_1 = arith.constant 0 : i32
    return %c0_i32, %c0_i32_0 : i32, i32
  }
  func.func @transform_2(%arg0: i32) -> (i32, i32) {
    %c0_i32 = arith.constant 0 : i32
    %c0_i32_0 = arith.constant 0 : i32
    %c0_i32_1 = arith.constant 0 : i32
    return %c0_i32, %c0_i32_0 : i32, i32
  }
  func.func @transform_3(%arg0: i32) -> (i32, i32, i32) {
    %c0_i32 = arith.constant 0 : i32
    %c0_i32_0 = arith.constant 0 : i32
    %c0_i32_1 = arith.constant 0 : i32
    return %arg0, %c0_i32, %c0_i32_0 : i32, i32, i32
  }
  func.func @transform_4(%arg0: i32) -> (i32, i32, i32) {
    %c0_i32 = arith.constant 0 : i32
    %c0_i32_0 = arith.constant 0 : i32
    %c0_i32_1 = arith.constant 0 : i32
    return %arg0, %c0_i32, %c0_i32_0 : i32, i32, i32
  }
  func.func @transform_5(%arg0: i32) -> (i32, i32) {
    %c0_i32 = arith.constant 0 : i32
    %c0_i32_0 = arith.constant 0 : i32
    return %c0_i32, %arg0 : i32, i32
  }
}

</mosaic_0001>

<llo_original>
// kernel: tpu_custom_call.1
$region0: #{tpu_custom_call.1}
  #allocation0 [shape = 'u32[]', space=smem, size = 0x4, offset = 0x4, fixed_abs, tag = 'smem constant byte address 0x4 - core index']
  #allocation1 [shape = 'u32[144,128]{1,0:T(1,128)}', space=vmem, size = 0x12000, scoped, tag = 'internal scratch']
  %s0 = inlined_call_operand.hbm [shape: f32[8,32], index: 0, kind: input, shape index: {}]
  %s1 = inlined_call_operand.hbm [shape: bf16[32,512], index: 1, kind: input, shape index: {}]
  %s2 = inlined_call_operand.vmem [shape: f32[1,512], index: 2, kind: input, shape index: {}]
  %s3 = inlined_call_operand.hbm [shape: bf16[2,512,512], index: 3, kind: input, shape index: {}]
  %s4 = inlined_call_operand.vmem [shape: f32[2,1,512], index: 4, kind: input, shape index: {}]
  %s5 = inlined_call_operand.hbm [shape: f32[8,1024], index: 5, kind: output, shape index: {}]
  %s6 = sld [smem:[#allocation0]]
  $region65: #{tpu_custom_call.1} parent=0
    _
  %s8 = ssub.s32 1, %s6
  %s9 = scalar_select 0, %s8, %s6
  $region1: #{tpu_custom_call.1} parent=0
    #allocation2 [shape = 'u8[4096]{0}', space=vmem, size = 0x1000, scoped, tag = 'input window, operand 0, single buffered']
    #allocation3 [shape = 's32[2]{0}', space=sflag, size = 0x8, scoped, tag = 'scoped memory for tpu_custom_call.1']
    #allocation4 [shape = 's32[2]{0}', space=sflag, size = 0x8, scoped, tag = 'scoped memory for tpu_custom_call.1']
    #allocation5 [shape = 'u8[32768]{0}', space=vmem, size = 0x8000, scoped, tag = 'input window, operand 1, single buffered']
    #allocation6 [shape = 's32[1]{0}', space=sflag, size = 0x4, scoped, tag = 'scoped memory for tpu_custom_call.1']
    #allocation7 [shape = 'u8[1048576]{0}', space=vmem, size = 0x100000, scoped, tag = 'input window, operand 3']
    #allocation8 [shape = 'u8[32768]{0}', space=vmem, size = 0x8000, scoped, tag = 'output window, operand 0']
    %10 = vsyncpa [#allocation3], 0
    %11 = vsyncpa [#allocation6], 0
    %12 = vsyncpa [#allocation4], 0
    %s13 = scalar_lea.sflag [#allocation4], 1
    %14 = vsyncpa %s13, 0
    loop: start=0, step=1, limit=4
    $region2: #{tpu_custom_call.1} parent=1 // loop_pre_header
      _
    $region3: #{tpu_custom_call.1} parent=1 // loop_header
      %s16 = sphi 0, %s20
      %p17 = scmp.ge.s32.totalorder %s16, 4
      %s24 = sphi 0, %s24
      %s26 = sphi 0, %s24
      %s27 = sphi 0, %s26
      %s41 = sphi 0, %s27
      %s45 = sphi 0, %s45
      %s47 = sphi 0, %s45
      %s48 = sphi 0, %s47
      %s62 = sphi 0, %s48
      %s66 = sphi 0, %s66
      %s68 = sphi 0, %s66
      %s69 = sphi 0, %s68
      %s83 = sphi 0, %s69
      %s89 = sphi 0, %s91
      %s92 = sphi 0, %s89
      %s93 = sphi 0, %s92
      %s109 = sphi 0, %s93
      %s115 = sphi 0, %s117
      %s118 = sphi 0, %s115
      %s119 = sphi 0, %s118
      %s135 = sphi 0, %s119
      %s141 = sphi 0, %s143
      %s144 = sphi 0, %s141
      %s145 = sphi 0, %s144
      %s161 = sphi 0, %s145
    $region4: #{tpu_custom_call.1} parent=1 // loop_header_branch
      %19 = sbr.rel (%p17) target = $region8
    $region5: #{tpu_custom_call.1} parent=1 // loop_body
      %s21 = ssub.s32 %s16, 1
      %s22 = ssub.s32 %s16, 2
      %s23 = sadd.s32 %s16, 1
      %s25 = sadd.s32 %s24, 1
      %p28 = scmp.eq.s32.totalorder %s16, 1
      %p29 = scmp.ne.s32.totalorder %s24, %s26
      %p30 = scmp.eq.s32.totalorder %s16, 0
      %p31 = por %p29, %p30
      %p32 = scmp.ne.s32.totalorder %s24, %s26
      %p33 = scmp.eq.s32.totalorder %s21, 1
      %p34 = por %p32, %p33
      %p35 = scmp.ne.s32.totalorder %s26, %s27
      %p36 = scmp.eq.s32.totalorder %s21, 0
      %p37 = por %p35, %p36
      %p38 = scmp.ne.s32.totalorder %s26, %s27
      %p39 = scmp.eq.s32.totalorder %s22, 1
      %p40 = por %p38, %p39
      %p42 = scmp.ne.s32.totalorder %s27, %s41
      %p43 = scmp.eq.s32.totalorder %s22, 0
      %p44 = por %p42, %p43
      %s46 = sadd.s32 %s45, 1
      %p49 = scmp.eq.s32.totalorder %s16, 1
      %p50 = scmp.ne.s32.totalorder %s45, %s47
      %p51 = scmp.eq.s32.totalorder %s16, 0
      %p52 = por %p50, %p51
      %p53 = scmp.ne.s32.totalorder %s45, %s47
      %p54 = scmp.eq.s32.totalorder %s21, 1
      %p55 = por %p53, %p54
      %p56 = scmp.ne.s32.totalorder %s47, %s48
      %p57 = scmp.eq.s32.totalorder %s21, 0
      %p58 = por %p56, %p57
      %p59 = scmp.ne.s32.totalorder %s47, %s48
      %p60 = scmp.eq.s32.totalorder %s22, 1
      %p61 = por %p59, %p60
      %p63 = scmp.ne.s32.totalorder %s48, %s62
      %p64 = scmp.eq.s32.totalorder %s22, 0
      %p65 = por %p63, %p64
      %s67 = sadd.s32 %s66, 1
      %p70 = scmp.eq.s32.totalorder %s16, 1
      %p71 = scmp.ne.s32.totalorder %s66, %s68
      %p72 = scmp.eq.s32.totalorder %s16, 0
      %p73 = por %p71, %p72
      %p74 = scmp.ne.s32.totalorder %s66, %s68
      %p75 = scmp.eq.s32.totalorder %s21, 1
      %p76 = por %p74, %p75
      %p77 = scmp.ne.s32.totalorder %s68, %s69
      %p78 = scmp.eq.s32.totalorder %s21, 0
      %p79 = por %p77, %p78
      %p80 = scmp.ne.s32.totalorder %s68, %s69
      %p81 = scmp.eq.s32.totalorder %s22, 1
      %p82 = por %p80, %p81
      %p84 = scmp.ne.s32.totalorder %s69, %s83
      %p85 = scmp.eq.s32.totalorder %s22, 0
      %p86 = por %p84, %p85
      %s87 = ssub.s32 %s16, %s23
      %p88 = scmp.eq.s32.totalorder %s87, 0
      %s90 = sadd.s32 %s89, 1
      %s91 = scalar_select %p88, %s89, %s90
      %p94 = pneg %p88
      %p95 = scmp.eq.s32.totalorder %s16, 1
      %p96 = por %p94, %p95
      %p97 = scmp.ne.s32.totalorder %s89, %s92
      %p98 = scmp.eq.s32.totalorder %s16, 0
      %p99 = por %p97, %p98
      %p100 = scmp.ne.s32.totalorder %s89, %s92
      %p101 = scmp.eq.s32.totalorder %s21, 1
      %p102 = por %p100, %p101
      %p103 = scmp.ne.s32.totalorder %s92, %s93
      %p104 = scmp.eq.s32.totalorder %s21, 0
      %p105 = por %p103, %p104
      %p106 = scmp.ne.s32.totalorder %s92, %s93
      %p107 = scmp.eq.s32.totalorder %s22, 1
      %p108 = por %p106, %p107
      %p110 = scmp.ne.s32.totalorder %s93, %s109
      %p111 = scmp.eq.s32.totalorder %s22, 0
      %p112 = por %p110, %p111
      %s113 = ssub.s32 %s16, %s23
      %p114 = scmp.eq.s32.totalorder %s113, 0
      %s116 = sadd.s32 %s115, 1
      %s117 = scalar_select %p114, %s115, %s116
      %p120 = pneg %p114
      %p121 = scmp.eq.s32.totalorder %s16, 1
      %p122 = por %p120, %p121
      %p123 = scmp.ne.s32.totalorder %s115, %s118
      %p124 = scmp.eq.s32.totalorder %s16, 0
      %p125 = por %p123, %p124
      %p126 = scmp.ne.s32.totalorder %s115, %s118
      %p127 = scmp.eq.s32.totalorder %s21, 1
      %p128 = por %p126, %p127
      %p129 = scmp.ne.s32.totalorder %s118, %s119
      %p130 = scmp.eq.s32.totalorder %s21, 0
      %p131 = por %p129, %p130
      %p132 = scmp.ne.s32.totalorder %s118, %s119
      %p133 = scmp.eq.s32.totalorder %s22, 1
      %p134 = por %p132, %p133
      %p136 = scmp.ne.s32.totalorder %s119, %s135
      %p137 = scmp.eq.s32.totalorder %s22, 0
      %p138 = por %p136, %p137
      %s139 = ssub.s32 %s16, %s23
      %p140 = scmp.eq.s32.totalorder %s139, 0
      %s142 = sadd.s32 %s141, 1
      %s143 = scalar_select %p140, %s141, %s142
      %p146 = pneg %p140
      %p147 = scmp.eq.s32.totalorder %s16, 1
      %p148 = por %p146, %p147
      %p149 = scmp.ne.s32.totalorder %s141, %s144
      %p150 = scmp.eq.s32.totalorder %s16, 0
      %p151 = por %p149, %p150
      %p152 = scmp.ne.s32.totalorder %s141, %s144
      %p153 = scmp.eq.s32.totalorder %s21, 1
      %p154 = por %p152, %p153
      %p155 = scmp.ne.s32.totalorder %s144, %s145
      %p156 = scmp.eq.s32.totalorder %s21, 0
      %p157 = por %p155, %p156
      %p158 = scmp.ne.s32.totalorder %s144, %s145
      %p159 = scmp.eq.s32.totalorder %s22, 1
      %p160 = por %p158, %p159
      %p162 = scmp.ne.s32.totalorder %s145, %s161
      %p163 = scmp.eq.s32.totalorder %s22, 0
      %p164 = por %p162, %p163
      %p165 = scmp.le.s32.totalorder 1, %s16
      %p166 = scmp.lt.s32.totalorder %s16, 3
      %p167 = pnand %p165, %p166
      %p168 = pneg %p167
      // Predicated region
      $region9: #{tpu_custom_call.1} parent=5 // pred_check
        _
      $region10: #{tpu_custom_call.1} parent=5 // pred_check_branch
        %170 = sbr.rel (%p167) target = $region12
      $region11: #{tpu_custom_call.1} parent=5 // pred_region
        %s171 = ssub.s32 %s16, 1
        // Predicated region
        $region13: #{tpu_custom_call.1} parent=11 // pred_check
          %p172 = pneg %p37
        $region14: #{tpu_custom_call.1} parent=11 // pred_check_branch
          %174 = sbr.rel (%p172) target = $region16
        $region15: #{tpu_custom_call.1} parent=11 // pred_region
          %s176 = ssub.s32 128, 128
          %177 = vsyncadd [#allocation3], %s176
          %s179 = sshll.u32 [#allocation2], 4
          %s180 = int_to_ptr.vmem [resolvable:$true] %s179
          %182 = dma.hbm_to_vmem [thread:$0]  %s0, 128, %s180, [#allocation3]
        $region16: #{tpu_custom_call.1} parent=11 // pred_fallthru
          _
        // Predicated region
        $region17: #{tpu_custom_call.1} parent=11 // pred_check
          %p183 = pneg %p58
        $region18: #{tpu_custom_call.1} parent=11 // pred_check_branch
          %185 = sbr.rel (%p183) target = $region20
        $region19: #{tpu_custom_call.1} parent=11 // pred_region
          %s187 = ssub.s32 1024, 1024
          %188 = vsyncadd [#allocation6], %s187
          %s189 = sshll.u32 [#allocation5], 4
          %s190 = int_to_ptr.vmem [resolvable:$true] %s189
          %195 = dma.hbm_to_vmem [thread:$0]  %s1, 1024, %s190, [#allocation6], 256, 256, 16
        $region20: #{tpu_custom_call.1} parent=11 // pred_fallthru
          _
        // Predicated region
        $region21: #{tpu_custom_call.1} parent=11 // pred_check
          %p196 = pneg %p79
        $region22: #{tpu_custom_call.1} parent=11 // pred_check_branch
          %198 = sbr.rel (%p196) target = $region24
        $region23: #{tpu_custom_call.1} parent=11 // pred_region
          _
        $region24: #{tpu_custom_call.1} parent=11 // pred_fallthru
          _
      $region12: #{tpu_custom_call.1} parent=5 // pred_fallthru
        _
      %p199 = scmp.lt.s32.totalorder %s16, 2
      // Predicated region
      $region25: #{tpu_custom_call.1} parent=5 // pred_check
        %p200 = pneg %p199
      $region26: #{tpu_custom_call.1} parent=5 // pred_check_branch
        %202 = sbr.rel (%p200) target = $region28
      $region27: #{tpu_custom_call.1} parent=5 // pred_region
        // Predicated region
        $region29: #{tpu_custom_call.1} parent=27 // pred_check
          %p203 = pneg %p99
        $region30: #{tpu_custom_call.1} parent=27 // pred_check_branch
          %205 = sbr.rel (%p203) target = $region32
        $region31: #{tpu_custom_call.1} parent=27 // pred_region
          %s206 = sand.u32 %s16, 1
          %s207 = scalar_lea.sflag [#allocation3], %s206
          %s208 = sand.u32 %s89, 1
          %s209 = smul.addr %s208, 1024
          %s210 = scalar_lea.vmem [#allocation7], %s209
          %s212 = ssub.s32 16384, 16384
          %213 = vsyncadd %s207, %s212
          %s214 = smul.addr %s16, 256
          %s215 = smul.addr %s214, 64
          %s216 = scalar_lea.hbm %s3, %s215
          %s217 = sshll.u32 %s210, 4
          %s218 = int_to_ptr.vmem [resolvable:$true] %s217
          %223 = dma.hbm_to_vmem [thread:$0]  %s216, 16384, %s218, %s207, 256, 256, 16
        $region32: #{tpu_custom_call.1} parent=27 // pred_fallthru
          _
        // Predicated region
        $region33: #{tpu_custom_call.1} parent=27 // pred_check
          %p224 = pneg %p125
        $region34: #{tpu_custom_call.1} parent=27 // pred_check_branch
          %226 = sbr.rel (%p224) target = $region36
        $region35: #{tpu_custom_call.1} parent=27 // pred_region
          %p227 = scmp.lt.s32.totalorder %s16, 1
          %s228 = scalar_select %p227, %s16, 1
          %s229 = smul.addr %s228, 4
          %s230 = scalar_lea.vmem %s4, %s229
        $region36: #{tpu_custom_call.1} parent=27 // pred_fallthru
          _
      $region28: #{tpu_custom_call.1} parent=5 // pred_fallthru
        _
      %p231 = scmp.le.s32.totalorder 1, %s16
      %p232 = scmp.lt.s32.totalorder %s16, 3
      %p233 = pnand %p231, %p232
      %p234 = pneg %p233
      // Predicated region
      $region37: #{tpu_custom_call.1} parent=5 // pred_check
        _
      $region38: #{tpu_custom_call.1} parent=5 // pred_check_branch
        %236 = sbr.rel (%p233) target = $region40
      $region39: #{tpu_custom_call.1} parent=5 // pred_region
        %s237 = ssub.s32 %s16, 1
        // Predicated region
        $region41: #{tpu_custom_call.1} parent=39 // pred_check
          %p238 = pneg %p37
        $region42: #{tpu_custom_call.1} parent=39 // pred_check_branch
          %240 = sbr.rel (%p238) target = $region44
        $region43: #{tpu_custom_call.1} parent=39 // pred_region
          %241 = dma.done [#allocation3], 128
        $region44: #{tpu_custom_call.1} parent=39 // pred_fallthru
          _
        // Predicated region
        $region45: #{tpu_custom_call.1} parent=39 // pred_check
          %p242 = pneg %p58
        $region46: #{tpu_custom_call.1} parent=39 // pred_check_branch
          %244 = sbr.rel (%p242) target = $region48
        $region47: #{tpu_custom_call.1} parent=39 // pred_region
          %245 = dma.done [#allocation6], 1024
        $region48: #{tpu_custom_call.1} parent=39 // pred_fallthru
          _
        %s246 = sand.u32 %s21, 1
        %s247 = scalar_lea.sflag [#allocation3], %s246
        %s248 = sand.u32 %s92, 1
        %s249 = smul.addr %s248, 1024
        %s250 = scalar_lea.vmem [#allocation7], %s249
        // Predicated region
        $region49: #{tpu_custom_call.1} parent=39 // pred_check
          %p251 = pneg %p105
        $region50: #{tpu_custom_call.1} parent=39 // pred_check_branch
          %253 = sbr.rel (%p251) target = $region52
        $region51: #{tpu_custom_call.1} parent=39 // pred_region
          %254 = dma.done %s247, 16384
        $region52: #{tpu_custom_call.1} parent=39 // pred_fallthru
          _
        %p255 = pneg %p37
        %p256 = pneg %p34
        %p257 = pneg %p58
        %p258 = pneg %p55
        %p259 = pneg %p79
        %p260 = pneg %p76
        %s261 = sand.u32 %s21, 1
        %s262 = scalar_lea.sflag [#allocation3], %s261
        %s263 = sand.u32 %s92, 1
        %s264 = smul.addr %s263, 1024
        %s265 = scalar_lea.vmem [#allocation7], %s264
        %p266 = pneg %p105
        %p267 = pneg %p102
        %p268 = scmp.lt.s32.totalorder %s21, 1
        %s269 = scalar_select %p268, %s21, 1
        %s270 = smul.addr %s269, 4
        %s271 = scalar_lea.vmem %s4, %s270
        %p272 = pneg %p131
        %p273 = pneg %p128
        %p274 = pneg %p157
        %p275 = pneg %p154
        %s276 = sand.u32 %s144, 1
        %s277 = scalar_lea.sflag [#allocation4], %s276
        %s278 = sand.u32 %s144, 1
        %s279 = smul.addr %s278, 32
        %s280 = scalar_lea.vmem [#allocation8], %s279
        %p281 = scmp.lt.s32.totalorder %s21, 1
        %s282 = scalar_select %p281, %s21, 1
        %s283 = smul.addr %s282, 4
        %s284 = scalar_lea.vmem %s4, %s283
        %s285 = smul.u32 4, %s21
        %v287 = vld [vmem:[#allocation2] sm:$0xff]
        %v288 = vpack.c.bf16 %v287, %v287
        %v289 = vld [vmem:[#allocation5] sm:$0xff]
        %v290 = vld [vmem:[#allocation5 + $0x8] sm:$0xff]
        %v291 = vld [vmem:[#allocation5 + $0x10] sm:$0xff]
        %v292 = vld [vmem:[#allocation5 + $0x18] sm:$0xff]
        %v293 = vld [vmem:[#allocation5 + $0x20] sm:$0xff]
        %v294 = vld [vmem:[#allocation5 + $0x28] sm:$0xff]
        %v295 = vld [vmem:[#allocation5 + $0x30] sm:$0xff]
        %v296 = vld [vmem:[#allocation5 + $0x38] sm:$0xff]
        %v297 = vld [vmem:[%s2] sm:$0xf]
        %v299 = vlaneseq
        %v300 = vshrl.u32 %v299, 7
        %v301 = vsub.s32 0, %v300
        %v302 = vrot.slane %v297, %v301
        %v303 = vlaneseq
        %v304 = vshrl.u32 %v303, 7
        %v305 = vsub.s32 1, %v304
        %v306 = vrot.slane %v297, %v305
        %v307 = vlaneseq
        %v308 = vshrl.u32 %v307, 7
        %v309 = vsub.s32 2, %v308
        %v310 = vrot.slane %v297, %v309
        %v311 = vlaneseq
        %v312 = vshrl.u32 %v311, 7
        %v313 = vsub.s32 3, %v312
        %v314 = vrot.slane %v297, %v313
        %v327 = vunpack.c.l.b16 %v289
        %v328 = vunpack.c.h.b16 %v289
        %v329 = vunpack.c.l.b16 %v290
        %v330 = vunpack.c.h.b16 %v290
        %v331 = vunpack.c.l.b16 %v291
        %v332 = vunpack.c.h.b16 %v291
        %v333 = vunpack.c.l.b16 %v292
        %v334 = vunpack.c.h.b16 %v292
        %v335 = vunpack.c.l.b16 %v293
        %v336 = vunpack.c.h.b16 %v293
        %v337 = vunpack.c.l.b16 %v294
        %v338 = vunpack.c.h.b16 %v294
        %v339 = vunpack.c.l.b16 %v295
        %v340 = vunpack.c.h.b16 %v295
        %v341 = vunpack.c.l.b16 %v296
        %v342 = vunpack.c.h.b16 %v296
        %v343 = vpack.c.b16 %v331, %v327
        %v344 = vpack.c.b16 %v332, %v328
        %v345 = vpack.c.b16 %v333, %v329
        %v346 = vpack.c.b16 %v334, %v330
        %v347 = vpack.c.b16 %v339, %v335
        %v348 = vpack.c.b16 %v340, %v336
        %v349 = vpack.c.b16 %v341, %v337
        %v350 = vpack.c.b16 %v342, %v338
        %vm359 = vcmask 261120
        %v361 = vsel %vm359, %v288, 0
        %363 = vmatprep.subr.bf16.mxu0 %v344
        %364 = vmatpush1.bf16.msra.mxu0 %v343
        %365 = vmatprep.subr.bf16.mxu0 %v348
        %366 = vmatpush1.bf16.msra.mxu0 %v347
        %367 = vmatprep.subr.bf16.mxu0 0
        %368 = vmatpush1.bf16.msra.mxu0 0
        %369 = vmatprep.subr.bf16.mxu0 0
        %370 = vmatpush1.bf16.msra.mxu0 0
        %371 = vmatprep.subr.bf16.mxu0 0
        %372 = vmatpush1.bf16.msra.mxu0 0
        %373 = vmatprep.subr.bf16.mxu0 0
        %374 = vmatpush1.bf16.msra.mxu0 0
        %375 = vmatprep.subr.bf16.mxu0 0
        %376 = vmatpush1.bf16.msra.mxu0 0
        %377 = vmatprep.subr.bf16.mxu0 0
        %378 = vmatpush1.bf16.msra.mxu0 0
        %379 = vmatprep.subr.bf16.mxu0 0
        %380 = vmatpush1.bf16.msra.mxu0 0
        %381 = vmatprep.subr.bf16.mxu0 0
        %382 = vmatpush1.bf16.msra.mxu0 0
        %383 = vmatprep.subr.bf16.mxu0 0
        %384 = vmatpush1.bf16.msra.mxu0 0
        %385 = vmatprep.subr.bf16.mxu0 0
        %386 = vmatpush1.bf16.msra.mxu0 0
        %387 = vmatprep.subr.bf16.mxu0 0
        %388 = vmatpush1.bf16.msra.mxu0 0
        %389 = vmatprep.subr.bf16.mxu0 0
        %390 = vmatpush1.bf16.msra.mxu0 0
        %391 = vmatprep.subr.bf16.mxu0 0
        %392 = vmatpush1.bf16.msra.mxu0 0
        %393 = vmatprep.subr.bf16.mxu0 0
        %394 = vmatpush1.bf16.msra.mxu0 0
        %395 = vmatprep.mubr.bf16.mxu0 0
        %396 = vmatmul.mubr.bf16.gmra.mrb[0].mxu0 %v361
        %v397 = vpop.f32.mrb[0].mxu0
        %v398 = vadd.f32 %v302, %v397
        %v399 = vpop.f32.mrb[0].mxu0
        %v400 = vadd.f32 %v306, %v399
        %v401 = vpop.f32.mrb[0].mxu0
        %v402 = vpop.f32.mrb[0].mxu0
        %403 = vdwg.mxu0
        %404 = vmatprep.subr.bf16.mxu0 %v346
        %405 = vmatpush1.bf16.msra.mxu0 %v345
        %406 = vmatprep.subr.bf16.mxu0 %v350
        %407 = vmatpush1.bf16.msra.mxu0 %v349
        %408 = vmatprep.subr.bf16.mxu0 0
        %409 = vmatpush1.bf16.msra.mxu0 0
        %410 = vmatprep.subr.bf16.mxu0 0
        %411 = vmatpush1.bf16.msra.mxu0 0
        %412 = vmatprep.subr.bf16.mxu0 0
        %413 = vmatpush1.bf16.msra.mxu0 0
        %414 = vmatprep.subr.bf16.mxu0 0
        %415 = vmatpush1.bf16.msra.mxu0 0
        %416 = vmatprep.subr.bf16.mxu0 0
        %417 = vmatpush1.bf16.msra.mxu0 0
        %418 = vmatprep.subr.bf16.mxu0 0
        %419 = vmatpush1.bf16.msra.mxu0 0
        %420 = vmatprep.subr.bf16.mxu0 0
        %421 = vmatpush1.bf16.msra.mxu0 0
        %422 = vmatprep.subr.bf16.mxu0 0
        %423 = vmatpush1.bf16.msra.mxu0 0
        %424 = vmatprep.subr.bf16.mxu0 0
        %425 = vmatpush1.bf16.msra.mxu0 0
        %426 = vmatprep.subr.bf16.mxu0 0
        %427 = vmatpush1.bf16.msra.mxu0 0
        %428 = vmatprep.subr.bf16.mxu0 0
        %429 = vmatpush1.bf16.msra.mxu0 0
        %430 = vmatprep.subr.bf16.mxu0 0
        %431 = vmatpush1.bf16.msra.mxu0 0
        %432 = vmatprep.subr.bf16.mxu0 0
        %433 = vmatpush1.bf16.msra.mxu0 0
        %434 = vmatprep.subr.bf16.mxu0 0
        %435 = vmatpush1.bf16.msra.mxu0 0
        %436 = vmatprep.mubr.bf16.mxu0 0
        %437 = vmatmul.mubr.bf16.gmra.mrb[0].mxu0 %v361
        %v438 = vpop.f32.mrb[0].mxu0
        %v439 = vadd.f32 %v310, %v438
        %v440 = vpop.f32.mrb[0].mxu0
        %v441 = vadd.f32 %v314, %v440
        %v442 = vpop.f32.mrb[0].mxu0
        %v443 = vpop.f32.mrb[0].mxu0
        %444 = vdwg.mxu0
        %v445 = vtanh.pop %v398
        %v446 = vtanh.pop %v400
        %v447 = vtanh.pop %v439
        %v448 = vtanh.pop %v441
        %v449 = vpack.c.bf16 %v445, %v445
        %v450 = vpack.c.bf16 %v446, %v446
        %v451 = vpack.c.bf16 %v447, %v447
        %v452 = vpack.c.bf16 %v448, %v448
        %v453 = vld [vmem:[%s250] sm:$0xff]
        %v454 = vld [vmem:[%s250 + $0x8] sm:$0xff]
        %v455 = vld [vmem:[%s250 + $0x10] sm:$0xff]
        %v456 = vld [vmem:[%s250 + $0x18] sm:$0xff]
        %v457 = vld [vmem:[%s250 + $0x20] sm:$0xff]
        %v458 = vld [vmem:[%s250 + $0x28] sm:$0xff]
        %v459 = vld [vmem:[%s250 + $0x30] sm:$0xff]
        %v460 = vld [vmem:[%s250 + $0x38] sm:$0xff]
        %v461 = vld [vmem:[%s250 + $0x40] sm:$0xff]
        %v462 = vld [vmem:[%s250 + $0x48] sm:$0xff]
        %v463 = vld [vmem:[%s250 + $0x50] sm:$0xff]
        %v464 = vld [vmem:[%s250 + $0x58] sm:$0xff]
        %v465 = vld [vmem:[%s250 + $0x60] sm:$0xff]
        %v466 = vld [vmem:[%s250 + $0x68] sm:$0xff]
        %v467 = vld [vmem:[%s250 + $0x70] sm:$0xff]
        %v468 = vld [vmem:[%s250 + $0x78] sm:$0xff]
        %v469 = vld [vmem:[%s250 + $0x80] sm:$0xff]
        %v470 = vld [vmem:[%s250 + $0x88] sm:$0xff]
        %v471 = vld [vmem:[%s250 + $0x90] sm:$0xff]
        %v472 = vld [vmem:[%s250 + $0x98] sm:$0xff]
        %v473 = vld [vmem:[%s250 + $0xa0] sm:$0xff]
        %v474 = vld [vmem:[%s250 + $0xa8] sm:$0xff]
        %v475 = vld [vmem:[%s250 + $0xb0] sm:$0xff]
        %v476 = vld [vmem:[%s250 + $0xb8] sm:$0xff]
        %v477 = vld [vmem:[%s250 + $0xc0] sm:$0xff]
        %v478 = vld [vmem:[%s250 + $0xc8] sm:$0xff]
        %v479 = vld [vmem:[%s250 + $0xd0] sm:$0xff]
        %v480 = vld [vmem:[%s250 + $0xd8] sm:$0xff]
        %v481 = vld [vmem:[%s250 + $0xe0] sm:$0xff]
        %v482 = vld [vmem:[%s250 + $0xe8] sm:$0xff]
        %v483 = vld [vmem:[%s250 + $0xf0] sm:$0xff]
        %v484 = vld [vmem:[%s250 + $0xf8] sm:$0xff]
        %v485 = vld [vmem:[%s250 + $0x100] sm:$0xff]
        %v486 = vld [vmem:[%s250 + $0x108] sm:$0xff]
        %v487 = vld [vmem:[%s250 + $0x110] sm:$0xff]
        %v488 = vld [vmem:[%s250 + $0x118] sm:$0xff]
        %v489 = vld [vmem:[%s250 + $0x120] sm:$0xff]
        %v490 = vld [vmem:[%s250 + $0x128] sm:$0xff]
        %v491 = vld [vmem:[%s250 + $0x130] sm:$0xff]
        %v492 = vld [vmem:[%s250 + $0x138] sm:$0xff]
        %v493 = vld [vmem:[%s250 + $0x140] sm:$0xff]
        %v494 = vld [vmem:[%s250 + $0x148] sm:$0xff]
        %v495 = vld [vmem:[%s250 + $0x150] sm:$0xff]
        %v496 = vld [vmem:[%s250 + $0x158] sm:$0xff]
        %v497 = vld [vmem:[%s250 + $0x160] sm:$0xff]
        %v498 = vld [vmem:[%s250 + $0x168] sm:$0xff]
        %v499 = vld [vmem:[%s250 + $0x170] sm:$0xff]
        %v500 = vld [vmem:[%s250 + $0x178] sm:$0xff]
        %v501 = vld [vmem:[%s250 + $0x180] sm:$0xff]
        %v502 = vld [vmem:[%s250 + $0x188] sm:$0xff]
        %v503 = vld [vmem:[%s250 + $0x190] sm:$0xff]
        %v504 = vld [vmem:[%s250 + $0x198] sm:$0xff]
        %v505 = vld [vmem:[%s250 + $0x1a0] sm:$0xff]
        %v506 = vld [vmem:[%s250 + $0x1a8] sm:$0xff]
        %v507 = vld [vmem:[%s250 + $0x1b0] sm:$0xff]
        %v508 = vld [vmem:[%s250 + $0x1b8] sm:$0xff]
        %v509 = vld [vmem:[%s250 + $0x1c0] sm:$0xff]
        %v510 = vld [vmem:[%s250 + $0x1c8] sm:$0xff]
        %v511 = vld [vmem:[%s250 + $0x1d0] sm:$0xff]
        %v512 = vld [vmem:[%s250 + $0x1d8] sm:$0xff]
        %v513 = vld [vmem:[%s250 + $0x1e0] sm:$0xff]
        %v514 = vld [vmem:[%s250 + $0x1e8] sm:$0xff]
        %v515 = vld [vmem:[%s250 + $0x1f0] sm:$0xff]
        %v516 = vld [vmem:[%s250 + $0x1f8] sm:$0xff]
        %v517 = vld [vmem:[%s250 + $0x200] sm:$0xff]
        %v518 = vld [vmem:[%s250 + $0x208] sm:$0xff]
        %v519 = vld [vmem:[%s250 + $0x210] sm:$0xff]
        %v520 = vld [vmem:[%s250 + $0x218] sm:$0xff]
        %v521 = vld [vmem:[%s250 + $0x220] sm:$0xff]
        %v522 = vld [vmem:[%s250 + $0x228] sm:$0xff]
        %v523 = vld [vmem:[%s250 + $0x230] sm:$0xff]
        %v524 = vld [vmem:[%s250 + $0x238] sm:$0xff]
        %v525 = vld [vmem:[%s250 + $0x240] sm:$0xff]
        %v526 = vld [vmem:[%s250 + $0x248] sm:$0xff]
        %v527 = vld [vmem:[%s250 + $0x250] sm:$0xff]
        %v528 = vld [vmem:[%s250 + $0x258] sm:$0xff]
        %v529 = vld [vmem:[%s250 + $0x260] sm:$0xff]
        %v530 = vld [vmem:[%s250 + $0x268] sm:$0xff]
        %v531 = vld [vmem:[%s250 + $0x270] sm:$0xff]
        %v532 = vld [vmem:[%s250 + $0x278] sm:$0xff]
        %v533 = vld [vmem:[%s250 + $0x280] sm:$0xff]
        %v534 = vld [vmem:[%s250 + $0x288] sm:$0xff]
        %v535 = vld [vmem:[%s250 + $0x290] sm:$0xff]
        %v536 = vld [vmem:[%s250 + $0x298] sm:$0xff]
        %v537 = vld [vmem:[%s250 + $0x2a0] sm:$0xff]
        %v538 = vld [vmem:[%s250 + $0x2a8] sm:$0xff]
        %v539 = vld [vmem:[%s250 + $0x2b0] sm:$0xff]
        %v540 = vld [vmem:[%s250 + $0x2b8] sm:$0xff]
        %v541 = vld [vmem:[%s250 + $0x2c0] sm:$0xff]
        %v542 = vld [vmem:[%s250 + $0x2c8] sm:$0xff]
        %v543 = vld [vmem:[%s250 + $0x2d0] sm:$0xff]
        %v544 = vld [vmem:[%s250 + $0x2d8] sm:$0xff]
        %v545 = vld [vmem:[%s250 + $0x2e0] sm:$0xff]
        %v546 = vld [vmem:[%s250 + $0x2e8] sm:$0xff]
        %v547 = vld [vmem:[%s250 + $0x2f0] sm:$0xff]
        %v548 = vld [vmem:[%s250 + $0x2f8] sm:$0xff]
        %v549 = vld [vmem:[%s250 + $0x300] sm:$0xff]
        %v550 = vld [vmem:[%s250 + $0x308] sm:$0xff]
        %v551 = vld [vmem:[%s250 + $0x310] sm:$0xff]
        %v552 = vld [vmem:[%s250 + $0x318] sm:$0xff]
        %v553 = vld [vmem:[%s250 + $0x320] sm:$0xff]
        %v554 = vld [vmem:[%s250 + $0x328] sm:$0xff]
        %v555 = vld [vmem:[%s250 + $0x330] sm:$0xff]
        %v556 = vld [vmem:[%s250 + $0x338] sm:$0xff]
        %v557 = vld [vmem:[%s250 + $0x340] sm:$0xff]
        %v558 = vld [vmem:[%s250 + $0x348] sm:$0xff]
        %v559 = vld [vmem:[%s250 + $0x350] sm:$0xff]
        %v560 = vld [vmem:[%s250 + $0x358] sm:$0xff]
        %v561 = vld [vmem:[%s250 + $0x360] sm:$0xff]
        %v562 = vld [vmem:[%s250 + $0x368] sm:$0xff]
        %v563 = vld [vmem:[%s250 + $0x370] sm:$0xff]
        %v564 = vld [vmem:[%s250 + $0x378] sm:$0xff]
        %v565 = vld [vmem:[%s250 + $0x380] sm:$0xff]
        %v566 = vld [vmem:[%s250 + $0x388] sm:$0xff]
        %v567 = vld [vmem:[%s250 + $0x390] sm:$0xff]
        %v568 = vld [vmem:[%s250 + $0x398] sm:$0xff]
        %v569 = vld [vmem:[%s250 + $0x3a0] sm:$0xff]
        %v570 = vld [vmem:[%s250 + $0x3a8] sm:$0xff]
        %v571 = vld [vmem:[%s250 + $0x3b0] sm:$0xff]
        %v572 = vld [vmem:[%s250 + $0x3b8] sm:$0xff]
        %v573 = vld [vmem:[%s250 + $0x3c0] sm:$0xff]
        %v574 = vld [vmem:[%s250 + $0x3c8] sm:$0xff]
        %v575 = vld [vmem:[%s250 + $0x3d0] sm:$0xff]
        %v576 = vld [vmem:[%s250 + $0x3d8] sm:$0xff]
        %v577 = vld [vmem:[%s250 + $0x3e0] sm:$0xff]
        %v578 = vld [vmem:[%s250 + $0x3e8] sm:$0xff]
        %v579 = vld [vmem:[%s250 + $0x3f0] sm:$0xff]
        %v580 = vld [vmem:[%s250 + $0x3f8] sm:$0xff]
        %v581 = vld [vmem:[%s284] sm:$0xf]
        %v583 = vlaneseq
        %v584 = vshrl.u32 %v583, 7
        %v585 = vsub.s32 0, %v584
        %v586 = vrot.slane %v581, %v585
        %v587 = vlaneseq
        %v588 = vshrl.u32 %v587, 7
        %v589 = vsub.s32 1, %v588
        %v590 = vrot.slane %v581, %v589
        %v591 = vlaneseq
        %v592 = vshrl.u32 %v591, 7
        %v593 = vsub.s32 2, %v592
        %v594 = vrot.slane %v581, %v593
        %v595 = vlaneseq
        %v596 = vshrl.u32 %v595, 7
        %v597 = vsub.s32 3, %v596
        %v598 = vrot.slane %v581, %v597
        %v731 = vunpack.c.l.b16 %v453
        %v732 = vunpack.c.h.b16 %v453
        %v733 = vunpack.c.l.b16 %v454
        %v734 = vunpack.c.h.b16 %v454
        %v735 = vunpack.c.l.b16 %v455
        %v736 = vunpack.c.h.b16 %v455
        %v737 = vunpack.c.l.b16 %v456
        %v738 = vunpack.c.h.b16 %v456
        %v739 = vunpack.c.l.b16 %v457
        %v740 = vunpack.c.h.b16 %v457
        %v741 = vunpack.c.l.b16 %v458
        %v742 = vunpack.c.h.b16 %v458
        %v743 = vunpack.c.l.b16 %v459
        %v744 = vunpack.c.h.b16 %v459
        %v745 = vunpack.c.l.b16 %v460
        %v746 = vunpack.c.h.b16 %v460
        %v747 = vunpack.c.l.b16 %v461
        %v748 = vunpack.c.h.b16 %v461
        %v749 = vunpack.c.l.b16 %v462
        %v750 = vunpack.c.h.b16 %v462
        %v751 = vunpack.c.l.b16 %v463
        %v752 = vunpack.c.h.b16 %v463
        %v753 = vunpack.c.l.b16 %v464
        %v754 = vunpack.c.h.b16 %v464
        %v755 = vunpack.c.l.b16 %v465
        %v756 = vunpack.c.h.b16 %v465
        %v757 = vunpack.c.l.b16 %v466
        %v758 = vunpack.c.h.b16 %v466
        %v759 = vunpack.c.l.b16 %v467
        %v760 = vunpack.c.h.b16 %v467
        %v761 = vunpack.c.l.b16 %v468
        %v762 = vunpack.c.h.b16 %v468
        %v763 = vunpack.c.l.b16 %v469
        %v764 = vunpack.c.h.b16 %v469
        %v765 = vunpack.c.l.b16 %v470
        %v766 = vunpack.c.h.b16 %v470
        %v767 = vunpack.c.l.b16 %v471
        %v768 = vunpack.c.h.b16 %v471
        %v769 = vunpack.c.l.b16 %v472
        %v770 = vunpack.c.h.b16 %v472
        %v771 = vunpack.c.l.b16 %v473
        %v772 = vunpack.c.h.b16 %v473
        %v773 = vunpack.c.l.b16 %v474
        %v774 = vunpack.c.h.b16 %v474
        %v775 = vunpack.c.l.b16 %v475
        %v776 = vunpack.c.h.b16 %v475
        %v777 = vunpack.c.l.b16 %v476
        %v778 = vunpack.c.h.b16 %v476
        %v779 = vunpack.c.l.b16 %v477
        %v780 = vunpack.c.h.b16 %v477
        %v781 = vunpack.c.l.b16 %v478
        %v782 = vunpack.c.h.b16 %v478
        %v783 = vunpack.c.l.b16 %v479
        %v784 = vunpack.c.h.b16 %v479
        %v785 = vunpack.c.l.b16 %v480
        %v786 = vunpack.c.h.b16 %v480
        %v787 = vunpack.c.l.b16 %v481
        %v788 = vunpack.c.h.b16 %v481
        %v789 = vunpack.c.l.b16 %v482
        %v790 = vunpack.c.h.b16 %v482
        %v791 = vunpack.c.l.b16 %v483
        %v792 = vunpack.c.h.b16 %v483
        %v793 = vunpack.c.l.b16 %v484
        %v794 = vunpack.c.h.b16 %v484
        %v795 = vunpack.c.l.b16 %v485
        %v796 = vunpack.c.h.b16 %v485
        %v797 = vunpack.c.l.b16 %v486
        %v798 = vunpack.c.h.b16 %v486
        %v799 = vunpack.c.l.b16 %v487
        %v800 = vunpack.c.h.b16 %v487
        %v801 = vunpack.c.l.b16 %v488
        %v802 = vunpack.c.h.b16 %v488
        %v803 = vunpack.c.l.b16 %v489
        %v804 = vunpack.c.h.b16 %v489
        %v805 = vunpack.c.l.b16 %v490
        %v806 = vunpack.c.h.b16 %v490
        %v807 = vunpack.c.l.b16 %v491
        %v808 = vunpack.c.h.b16 %v491
        %v809 = vunpack.c.l.b16 %v492
        %v810 = vunpack.c.h.b16 %v492
        %v811 = vunpack.c.l.b16 %v493
        %v812 = vunpack.c.h.b16 %v493
        %v813 = vunpack.c.l.b16 %v494
        %v814 = vunpack.c.h.b16 %v494
        %v815 = vunpack.c.l.b16 %v495
        %v816 = vunpack.c.h.b16 %v495
        %v817 = vunpack.c.l.b16 %v496
        %v818 = vunpack.c.h.b16 %v496
        %v819 = vunpack.c.l.b16 %v497
        %v820 = vunpack.c.h.b16 %v497
        %v821 = vunpack.c.l.b16 %v498
        %v822 = vunpack.c.h.b16 %v498
        %v823 = vunpack.c.l.b16 %v499
        %v824 = vunpack.c.h.b16 %v499
        %v825 = vunpack.c.l.b16 %v500
        %v826 = vunpack.c.h.b16 %v500
        %v827 = vunpack.c.l.b16 %v501
        %v828 = vunpack.c.h.b16 %v501
        %v829 = vunpack.c.l.b16 %v502
        %v830 = vunpack.c.h.b16 %v502
        %v831 = vunpack.c.l.b16 %v503
        %v832 = vunpack.c.h.b16 %v503
        %v833 = vunpack.c.l.b16 %v504
        %v834 = vunpack.c.h.b16 %v504
        %v835 = vunpack.c.l.b16 %v505
        %v836 = vunpack.c.h.b16 %v505
        %v837 = vunpack.c.l.b16 %v506
        %v838 = vunpack.c.h.b16 %v506
        %v839 = vunpack.c.l.b16 %v507
        %v840 = vunpack.c.h.b16 %v507
        %v841 = vunpack.c.l.b16 %v508
        %v842 = vunpack.c.h.b16 %v508
        %v843 = vunpack.c.l.b16 %v509
        %v844 = vunpack.c.h.b16 %v509
        %v845 = vunpack.c.l.b16 %v510
        %v846 = vunpack.c.h.b16 %v510
        %v847 = vunpack.c.l.b16 %v511
        %v848 = vunpack.c.h.b16 %v511
        %v849 = vunpack.c.l.b16 %v512
        %v850 = vunpack.c.h.b16 %v512
        %v851 = vunpack.c.l.b16 %v513
        %v852 = vunpack.c.h.b16 %v513
        %v853 = vunpack.c.l.b16 %v514
        %v854 = vunpack.c.h.b16 %v514
        %v855 = vunpack.c.l.b16 %v515
        %v856 = vunpack.c.h.b16 %v515
        %v857 = vunpack.c.l.b16 %v516
        %v858 = vunpack.c.h.b16 %v516
        %v859 = vunpack.c.l.b16 %v517
        %v860 = vunpack.c.h.b16 %v517
        %v861 = vunpack.c.l.b16 %v518
        %v862 = vunpack.c.h.b16 %v518
        %v863 = vunpack.c.l.b16 %v519
        %v864 = vunpack.c.h.b16 %v519
        %v865 = vunpack.c.l.b16 %v520
        %v866 = vunpack.c.h.b16 %v520
        %v867 = vunpack.c.l.b16 %v521
        %v868 = vunpack.c.h.b16 %v521
        %v869 = vunpack.c.l.b16 %v522
        %v870 = vunpack.c.h.b16 %v522
        %v871 = vunpack.c.l.b16 %v523
        %v872 = vunpack.c.h.b16 %v523
        %v873 = vunpack.c.l.b16 %v524
        %v874 = vunpack.c.h.b16 %v524
        %v875 = vunpack.c.l.b16 %v525
        %v876 = vunpack.c.h.b16 %v525
        %v877 = vunpack.c.l.b16 %v526
        %v878 = vunpack.c.h.b16 %v526
        %v879 = vunpack.c.l.b16 %v527
        %v880 = vunpack.c.h.b16 %v527
        %v881 = vunpack.c.l.b16 %v528
        %v882 = vunpack.c.h.b16 %v528
        %v883 = vunpack.c.l.b16 %v529
        %v884 = vunpack.c.h.b16 %v529
        %v885 = vunpack.c.l.b16 %v530
        %v886 = vunpack.c.h.b16 %v530
        %v887 = vunpack.c.l.b16 %v531
        %v888 = vunpack.c.h.b16 %v531
        %v889 = vunpack.c.l.b16 %v532
        %v890 = vunpack.c.h.b16 %v532
        %v891 = vunpack.c.l.b16 %v533
        %v892 = vunpack.c.h.b16 %v533
        %v893 = vunpack.c.l.b16 %v534
        %v894 = vunpack.c.h.b16 %v534
        %v895 = vunpack.c.l.b16 %v535
        %v896 = vunpack.c.h.b16 %v535
        %v897 = vunpack.c.l.b16 %v536
        %v898 = vunpack.c.h.b16 %v536
        %v899 = vunpack.c.l.b16 %v537
        %v900 = vunpack.c.h.b16 %v537
        %v901 = vunpack.c.l.b16 %v538
        %v902 = vunpack.c.h.b16 %v538
        %v903 = vunpack.c.l.b16 %v539
        %v904 = vunpack.c.h.b16 %v539
        %v905 = vunpack.c.l.b16 %v540
        %v906 = vunpack.c.h.b16 %v540
        %v907 = vunpack.c.l.b16 %v541
        %v908 = vunpack.c.h.b16 %v541
        %v909 = vunpack.c.l.b16 %v542
        %v910 = vunpack.c.h.b16 %v542
        %v911 = vunpack.c.l.b16 %v543
        %v912 = vunpack.c.h.b16 %v543
        %v913 = vunpack.c.l.b16 %v544
        %v914 = vunpack.c.h.b16 %v544
        %v915 = vunpack.c.l.b16 %v545
        %v916 = vunpack.c.h.b16 %v545
        %v917 = vunpack.c.l.b16 %v546
        %v918 = vunpack.c.h.b16 %v546
        %v919 = vunpack.c.l.b16 %v547
        %v920 = vunpack.c.h.b16 %v547
        %v921 = vunpack.c.l.b16 %v548
        %v922 = vunpack.c.h.b16 %v548
        %v923 = vunpack.c.l.b16 %v549
        %v924 = vunpack.c.h.b16 %v549
        %v925 = vunpack.c.l.b16 %v550
        %v926 = vunpack.c.h.b16 %v550
        %v927 = vunpack.c.l.b16 %v551
        %v928 = vunpack.c.h.b16 %v551
        %v929 = vunpack.c.l.b16 %v552
        %v930 = vunpack.c.h.b16 %v552
        %v931 = vunpack.c.l.b16 %v553
        %v932 = vunpack.c.h.b16 %v553
        %v933 = vunpack.c.l.b16 %v554
        %v934 = vunpack.c.h.b16 %v554
        %v935 = vunpack.c.l.b16 %v555
        %v936 = vunpack.c.h.b16 %v555
        %v937 = vunpack.c.l.b16 %v556
        %v938 = vunpack.c.h.b16 %v556
        %v939 = vunpack.c.l.b16 %v557
        %v940 = vunpack.c.h.b16 %v557
        %v941 = vunpack.c.l.b16 %v558
        %v942 = vunpack.c.h.b16 %v558
        %v943 = vunpack.c.l.b16 %v559
        %v944 = vunpack.c.h.b16 %v559
        %v945 = vunpack.c.l.b16 %v560
        %v946 = vunpack.c.h.b16 %v560
        %v947 = vunpack.c.l.b16 %v561
        %v948 = vunpack.c.h.b16 %v561
        %v949 = vunpack.c.l.b16 %v562
        %v950 = vunpack.c.h.b16 %v562
        %v951 = vunpack.c.l.b16 %v563
        %v952 = vunpack.c.h.b16 %v563
        %v953 = vunpack.c.l.b16 %v564
        %v954 = vunpack.c.h.b16 %v564
        %v955 = vunpack.c.l.b16 %v565
        %v956 = vunpack.c.h.b16 %v565
        %v957 = vunpack.c.l.b16 %v566
        %v958 = vunpack.c.h.b16 %v566
        %v959 = vunpack.c.l.b16 %v567
        %v960 = vunpack.c.h.b16 %v567
        %v961 = vunpack.c.l.b16 %v568
        %v962 = vunpack.c.h.b16 %v568
        %v963 = vunpack.c.l.b16 %v569
        %v964 = vunpack.c.h.b16 %v569
        %v965 = vunpack.c.l.b16 %v570
        %v966 = vunpack.c.h.b16 %v570
        %v967 = vunpack.c.l.b16 %v571
        %v968 = vunpack.c.h.b16 %v571
        %v969 = vunpack.c.l.b16 %v572
        %v970 = vunpack.c.h.b16 %v572
        %v971 = vunpack.c.l.b16 %v573
        %v972 = vunpack.c.h.b16 %v573
        %v973 = vunpack.c.l.b16 %v574
        %v974 = vunpack.c.h.b16 %v574
        %v975 = vunpack.c.l.b16 %v575
        %v976 = vunpack.c.h.b16 %v575
        %v977 = vunpack.c.l.b16 %v576
        %v978 = vunpack.c.h.b16 %v576
        %v979 = vunpack.c.l.b16 %v577
        %v980 = vunpack.c.h.b16 %v577
        %v981 = vunpack.c.l.b16 %v578
        %v982 = vunpack.c.h.b16 %v578
        %v983 = vunpack.c.l.b16 %v579
        %v984 = vunpack.c.h.b16 %v579
        %v985 = vunpack.c.l.b16 %v580
        %v986 = vunpack.c.h.b16 %v580
        %v987 = vpack.c.b16 %v735, %v731
        %v988 = vpack.c.b16 %v736, %v732
        %v989 = vpack.c.b16 %v737, %v733
        %v990 = vpack.c.b16 %v738, %v734
        %v991 = vpack.c.b16 %v743, %v739
        %v992 = vpack.c.b16 %v744, %v740
        %v993 = vpack.c.b16 %v745, %v741
        %v994 = vpack.c.b16 %v746, %v742
        %v995 = vpack.c.b16 %v751, %v747
        %v996 = vpack.c.b16 %v752, %v748
        %v997 = vpack.c.b16 %v753, %v749
        %v998 = vpack.c.b16 %v754, %v750
        %v999 = vpack.c.b16 %v759, %v755
        %v1000 = vpack.c.b16 %v760, %v756
        %v1001 = vpack.c.b16 %v761, %v757
        %v1002 = vpack.c.b16 %v762, %v758
        %v1003 = vpack.c.b16 %v767, %v763
        %v1004 = vpack.c.b16 %v768, %v764
        %v1005 = vpack.c.b16 %v769, %v765
        %v1006 = vpack.c.b16 %v770, %v766
        %v1007 = vpack.c.b16 %v775, %v771
        %v1008 = vpack.c.b16 %v776, %v772
        %v1009 = vpack.c.b16 %v777, %v773
        %v1010 = vpack.c.b16 %v778, %v774
        %v1011 = vpack.c.b16 %v783, %v779
        %v1012 = vpack.c.b16 %v784, %v780
        %v1013 = vpack.c.b16 %v785, %v781
        %v1014 = vpack.c.b16 %v786, %v782
        %v1015 = vpack.c.b16 %v791, %v787
        %v1016 = vpack.c.b16 %v792, %v788
        %v1017 = vpack.c.b16 %v793, %v789
        %v1018 = vpack.c.b16 %v794, %v790
        %v1019 = vpack.c.b16 %v799, %v795
        %v1020 = vpack.c.b16 %v800, %v796
        %v1021 = vpack.c.b16 %v801, %v797
        %v1022 = vpack.c.b16 %v802, %v798
        %v1023 = vpack.c.b16 %v807, %v803
        %v1024 = vpack.c.b16 %v808, %v804
        %v1025 = vpack.c.b16 %v809, %v805
        %v1026 = vpack.c.b16 %v810, %v806
        %v1027 = vpack.c.b16 %v815, %v811
        %v1028 = vpack.c.b16 %v816, %v812
        %v1029 = vpack.c.b16 %v817, %v813
        %v1030 = vpack.c.b16 %v818, %v814
        %v1031 = vpack.c.b16 %v823, %v819
        %v1032 = vpack.c.b16 %v824, %v820
        %v1033 = vpack.c.b16 %v825, %v821
        %v1034 = vpack.c.b16 %v826, %v822
        %v1035 = vpack.c.b16 %v831, %v827
        %v1036 = vpack.c.b16 %v832, %v828
        %v1037 = vpack.c.b16 %v833, %v829
        %v1038 = vpack.c.b16 %v834, %v830
        %v1039 = vpack.c.b16 %v839, %v835
        %v1040 = vpack.c.b16 %v840, %v836
        %v1041 = vpack.c.b16 %v841, %v837
        %v1042 = vpack.c.b16 %v842, %v838
        %v1043 = vpack.c.b16 %v847, %v843
        %v1044 = vpack.c.b16 %v848, %v844
        %v1045 = vpack.c.b16 %v849, %v845
        %v1046 = vpack.c.b16 %v850, %v846
        %v1047 = vpack.c.b16 %v855, %v851
        %v1048 = vpack.c.b16 %v856, %v852
        %v1049 = vpack.c.b16 %v857, %v853
        %v1050 = vpack.c.b16 %v858, %v854
        %v1051 = vpack.c.b16 %v863, %v859
        %v1052 = vpack.c.b16 %v864, %v860
        %v1053 = vpack.c.b16 %v865, %v861
        %v1054 = vpack.c.b16 %v866, %v862
        %v1055 = vpack.c.b16 %v871, %v867
        %v1056 = vpack.c.b16 %v872, %v868
        %v1057 = vpack.c.b16 %v873, %v869
        %v1058 = vpack.c.b16 %v874, %v870
        %v1059 = vpack.c.b16 %v879, %v875
        %v1060 = vpack.c.b16 %v880, %v876
        %v1061 = vpack.c.b16 %v881, %v877
        %v1062 = vpack.c.b16 %v882, %v878
        %v1063 = vpack.c.b16 %v887, %v883
        %v1064 = vpack.c.b16 %v888, %v884
        %v1065 = vpack.c.b16 %v889, %v885
        %v1066 = vpack.c.b16 %v890, %v886
        %v1067 = vpack.c.b16 %v895, %v891
        %v1068 = vpack.c.b16 %v896, %v892
        %v1069 = vpack.c.b16 %v897, %v893
        %v1070 = vpack.c.b16 %v898, %v894
        %v1071 = vpack.c.b16 %v903, %v899
        %v1072 = vpack.c.b16 %v904, %v900
        %v1073 = vpack.c.b16 %v905, %v901
        %v1074 = vpack.c.b16 %v906, %v902
        %v1075 = vpack.c.b16 %v911, %v907
        %v1076 = vpack.c.b16 %v912, %v908
        %v1077 = vpack.c.b16 %v913, %v909
        %v1078 = vpack.c.b16 %v914, %v910
        %v1079 = vpack.c.b16 %v919, %v915
        %v1080 = vpack.c.b16 %v920, %v916
        %v1081 = vpack.c.b16 %v921, %v917
        %v1082 = vpack.c.b16 %v922, %v918
        %v1083 = vpack.c.b16 %v927, %v923
        %v1084 = vpack.c.b16 %v928, %v924
        %v1085 = vpack.c.b16 %v929, %v925
        %v1086 = vpack.c.b16 %v930, %v926
        %v1087 = vpack.c.b16 %v935, %v931
        %v1088 = vpack.c.b16 %v936, %v932
        %v1089 = vpack.c.b16 %v937, %v933
        %v1090 = vpack.c.b16 %v938, %v934
        %v1091 = vpack.c.b16 %v943, %v939
        %v1092 = vpack.c.b16 %v944, %v940
        %v1093 = vpack.c.b16 %v945, %v941
        %v1094 = vpack.c.b16 %v946, %v942
        %v1095 = vpack.c.b16 %v951, %v947
        %v1096 = vpack.c.b16 %v952, %v948
        %v1097 = vpack.c.b16 %v953, %v949
        %v1098 = vpack.c.b16 %v954, %v950
        %v1099 = vpack.c.b16 %v959, %v955
        %v1100 = vpack.c.b16 %v960, %v956
        %v1101 = vpack.c.b16 %v961, %v957
        %v1102 = vpack.c.b16 %v962, %v958
        %v1103 = vpack.c.b16 %v967, %v963
        %v1104 = vpack.c.b16 %v968, %v964
        %v1105 = vpack.c.b16 %v969, %v965
        %v1106 = vpack.c.b16 %v970, %v966
        %v1107 = vpack.c.b16 %v975, %v971
        %v1108 = vpack.c.b16 %v976, %v972
        %v1109 = vpack.c.b16 %v977, %v973
        %v1110 = vpack.c.b16 %v978, %v974
        %v1111 = vpack.c.b16 %v983, %v979
        %v1112 = vpack.c.b16 %v984, %v980
        %v1113 = vpack.c.b16 %v985, %v981
        %v1114 = vpack.c.b16 %v986, %v982
        %1243 = vmatprep.subr.bf16.mxu0 %v988
        %1244 = vmatpush1.bf16.msra.mxu0 %v987
        %1245 = vmatprep.subr.bf16.mxu0 %v992
        %1246 = vmatpush1.bf16.msra.mxu0 %v991
        %1247 = vmatprep.subr.bf16.mxu0 %v996
        %1248 = vmatpush1.bf16.msra.mxu0 %v995
        %1249 = vmatprep.subr.bf16.mxu0 %v1000
        %1250 = vmatpush1.bf16.msra.mxu0 %v999
        %1251 = vmatprep.subr.bf16.mxu0 %v1004
        %1252 = vmatpush1.bf16.msra.mxu0 %v1003
        %1253 = vmatprep.subr.bf16.mxu0 %v1008
        %1254 = vmatpush1.bf16.msra.mxu0 %v1007
        %1255 = vmatprep.subr.bf16.mxu0 %v1012
        %1256 = vmatpush1.bf16.msra.mxu0 %v1011
        %1257 = vmatprep.subr.bf16.mxu0 %v1016
        %1258 = vmatpush1.bf16.msra.mxu0 %v1015
        %1259 = vmatprep.subr.bf16.mxu0 %v1020
        %1260 = vmatpush1.bf16.msra.mxu0 %v1019
        %1261 = vmatprep.subr.bf16.mxu0 %v1024
        %1262 = vmatpush1.bf16.msra.mxu0 %v1023
        %1263 = vmatprep.subr.bf16.mxu0 %v1028
        %1264 = vmatpush1.bf16.msra.mxu0 %v1027
        %1265 = vmatprep.subr.bf16.mxu0 %v1032
        %1266 = vmatpush1.bf16.msra.mxu0 %v1031
        %1267 = vmatprep.subr.bf16.mxu0 %v1036
        %1268 = vmatpush1.bf16.msra.mxu0 %v1035
        %1269 = vmatprep.subr.bf16.mxu0 %v1040
        %1270 = vmatpush1.bf16.msra.mxu0 %v1039
        %1271 = vmatprep.subr.bf16.mxu0 %v1044
        %1272 = vmatpush1.bf16.msra.mxu0 %v1043
        %1273 = vmatprep.subr.bf16.mxu0 %v1048
        %1274 = vmatpush1.bf16.msra.mxu0 %v1047
        %1275 = vmatprep.mubr.bf16.mxu0 %v450
        %1276 = vmatmul.mubr.bf16.gmra.mrb[0].mxu0 %v449
        %v1277 = vpop.f32.mrb[0].mxu0
        %v1278 = vadd.f32 %v586, %v1277
        %v1279 = vpop.f32.mrb[0].mxu0
        %v1280 = vadd.f32 %v590, %v1279
        %v1281 = vpop.f32.mrb[0].mxu0
        %v1282 = vpop.f32.mrb[0].mxu0
        %1283 = vdwg.mxu0
        %1284 = vmatprep.subr.bf16.mxu0 %v1052
        %1285 = vmatpush1.bf16.msra.mxu0 %v1051
        %1286 = vmatprep.subr.bf16.mxu0 %v1056
        %1287 = vmatpush1.bf16.msra.mxu0 %v1055
        %1288 = vmatprep.subr.bf16.mxu0 %v1060
        %1289 = vmatpush1.bf16.msra.mxu0 %v1059
        %1290 = vmatprep.subr.bf16.mxu0 %v1064
        %1291 = vmatpush1.bf16.msra.mxu0 %v1063
        %1292 = vmatprep.subr.bf16.mxu0 %v1068
        %1293 = vmatpush1.bf16.msra.mxu0 %v1067
        %1294 = vmatprep.subr.bf16.mxu0 %v1072
        %1295 = vmatpush1.bf16.msra.mxu0 %v1071
        %1296 = vmatprep.subr.bf16.mxu0 %v1076
        %1297 = vmatpush1.bf16.msra.mxu0 %v1075
        %1298 = vmatprep.subr.bf16.mxu0 %v1080
        %1299 = vmatpush1.bf16.msra.mxu0 %v1079
        %1300 = vmatprep.subr.bf16.mxu0 %v1084
        %1301 = vmatpush1.bf16.msra.mxu0 %v1083
        %1302 = vmatprep.subr.bf16.mxu0 %v1088
        %1303 = vmatpush1.bf16.msra.mxu0 %v1087
        %1304 = vmatprep.subr.bf16.mxu0 %v1092
        %1305 = vmatpush1.bf16.msra.mxu0 %v1091
        %1306 = vmatprep.subr.bf16.mxu0 %v1096
        %1307 = vmatpush1.bf16.msra.mxu0 %v1095
        %1308 = vmatprep.subr.bf16.mxu0 %v1100
        %1309 = vmatpush1.bf16.msra.mxu0 %v1099
        %1310 = vmatprep.subr.bf16.mxu0 %v1104
        %1311 = vmatpush1.bf16.msra.mxu0 %v1103
        %1312 = vmatprep.subr.bf16.mxu0 %v1108
        %1313 = vmatpush1.bf16.msra.mxu0 %v1107
        %1314 = vmatprep.subr.bf16.mxu0 %v1112
        %1315 = vmatpush1.bf16.msra.mxu0 %v1111
        %1316 = vmatprep.mubr.bf16.mxu0 %v452
        %1317 = vmatmul.mubr.bf16.gmra.mrb[0].mxu0 %v451
        %v1318 = vpop.f32.mrb[0].mxu0
        %v1319 = vadd.f32 %v1278, %v1318
        %v1320 = vpop.f32.mrb[0].mxu0
        %v1321 = vadd.f32 %v1280, %v1320
        %v1322 = vpop.f32.mrb[0].mxu0
        %v1323 = vpop.f32.mrb[0].mxu0
        %1324 = vdwg.mxu0
        %1325 = vmatprep.subr.bf16.mxu0 %v990
        %1326 = vmatpush1.bf16.msra.mxu0 %v989
        %1327 = vmatprep.subr.bf16.mxu0 %v994
        %1328 = vmatpush1.bf16.msra.mxu0 %v993
        %1329 = vmatprep.subr.bf16.mxu0 %v998
        %1330 = vmatpush1.bf16.msra.mxu0 %v997
        %1331 = vmatprep.subr.bf16.mxu0 %v1002
        %1332 = vmatpush1.bf16.msra.mxu0 %v1001
        %1333 = vmatprep.subr.bf16.mxu0 %v1006
        %1334 = vmatpush1.bf16.msra.mxu0 %v1005
        %1335 = vmatprep.subr.bf16.mxu0 %v1010
        %1336 = vmatpush1.bf16.msra.mxu0 %v1009
        %1337 = vmatprep.subr.bf16.mxu0 %v1014
        %1338 = vmatpush1.bf16.msra.mxu0 %v1013
        %1339 = vmatprep.subr.bf16.mxu0 %v1018
        %1340 = vmatpush1.bf16.msra.mxu0 %v1017
        %1341 = vmatprep.subr.bf16.mxu0 %v1022
        %1342 = vmatpush1.bf16.msra.mxu0 %v1021
        %1343 = vmatprep.subr.bf16.mxu0 %v1026
        %1344 = vmatpush1.bf16.msra.mxu0 %v1025
        %1345 = vmatprep.subr.bf16.mxu0 %v1030
        %1346 = vmatpush1.bf16.msra.mxu0 %v1029
        %1347 = vmatprep.subr.bf16.mxu0 %v1034
        %1348 = vmatpush1.bf16.msra.mxu0 %v1033
        %1349 = vmatprep.subr.bf16.mxu0 %v1038
        %1350 = vmatpush1.bf16.msra.mxu0 %v1037
        %1351 = vmatprep.subr.bf16.mxu0 %v1042
        %1352 = vmatpush1.bf16.msra.mxu0 %v1041
        %1353 = vmatprep.subr.bf16.mxu0 %v1046
        %1354 = vmatpush1.bf16.msra.mxu0 %v1045
        %1355 = vmatprep.subr.bf16.mxu0 %v1050
        %1356 = vmatpush1.bf16.msra.mxu0 %v1049
        %1357 = vmatprep.mubr.bf16.mxu0 %v450
        %1358 = vmatmul.mubr.bf16.gmra.mrb[0].mxu0 %v449
        %v1359 = vpop.f32.mrb[0].mxu0
        %v1360 = vadd.f32 %v594, %v1359
        %v1361 = vpop.f32.mrb[0].mxu0
        %v1362 = vadd.f32 %v598, %v1361
        %v1363 = vpop.f32.mrb[0].mxu0
        %v1364 = vpop.f32.mrb[0].mxu0
        %1365 = vdwg.mxu0
        %1366 = vmatprep.subr.bf16.mxu0 %v1054
        %1367 = vmatpush1.bf16.msra.mxu0 %v1053
        %1368 = vmatprep.subr.bf16.mxu0 %v1058
        %1369 = vmatpush1.bf16.msra.mxu0 %v1057
        %1370 = vmatprep.subr.bf16.mxu0 %v1062
        %1371 = vmatpush1.bf16.msra.mxu0 %v1061
        %1372 = vmatprep.subr.bf16.mxu0 %v1066
        %1373 = vmatpush1.bf16.msra.mxu0 %v1065
        %1374 = vmatprep.subr.bf16.mxu0 %v1070
        %1375 = vmatpush1.bf16.msra.mxu0 %v1069
        %1376 = vmatprep.subr.bf16.mxu0 %v1074
        %1377 = vmatpush1.bf16.msra.mxu0 %v1073
        %1378 = vmatprep.subr.bf16.mxu0 %v1078
        %1379 = vmatpush1.bf16.msra.mxu0 %v1077
        %1380 = vmatprep.subr.bf16.mxu0 %v1082
        %1381 = vmatpush1.bf16.msra.mxu0 %v1081
        %1382 = vmatprep.subr.bf16.mxu0 %v1086
        %1383 = vmatpush1.bf16.msra.mxu0 %v1085
        %1384 = vmatprep.subr.bf16.mxu0 %v1090
        %1385 = vmatpush1.bf16.msra.mxu0 %v1089
        %1386 = vmatprep.subr.bf16.mxu0 %v1094
        %1387 = vmatpush1.bf16.msra.mxu0 %v1093
        %1388 = vmatprep.subr.bf16.mxu0 %v1098
        %1389 = vmatpush1.bf16.msra.mxu0 %v1097
        %1390 = vmatprep.subr.bf16.mxu0 %v1102
        %1391 = vmatpush1.bf16.msra.mxu0 %v1101
        %1392 = vmatprep.subr.bf16.mxu0 %v1106
        %1393 = vmatpush1.bf16.msra.mxu0 %v1105
        %1394 = vmatprep.subr.bf16.mxu0 %v1110
        %1395 = vmatpush1.bf16.msra.mxu0 %v1109
        %1396 = vmatprep.subr.bf16.mxu0 %v1114
        %1397 = vmatpush1.bf16.msra.mxu0 %v1113
        %1398 = vmatprep.mubr.bf16.mxu0 %v452
        %1399 = vmatmul.mubr.bf16.gmra.mrb[0].mxu0 %v451
        %v1400 = vpop.f32.mrb[0].mxu0
        %v1401 = vadd.f32 %v1360, %v1400
        %v1402 = vpop.f32.mrb[0].mxu0
        %v1403 = vadd.f32 %v1362, %v1402
        %v1404 = vpop.f32.mrb[0].mxu0
        %v1405 = vpop.f32.mrb[0].mxu0
        %1406 = vdwg.mxu0
        %v1407 = vxor.u32 %v1319, 2147483648
        %v1408 = vxor.u32 %v1321, 2147483648
        %v1409 = vxor.u32 %v1401, 2147483648
        %v1410 = vxor.u32 %v1403, 2147483648
        %v1411 = vmul.f32 %v1407, 1.442695
        %v1412 = vpow.pop %v1411
        %v1413 = vmul.f32 %v1408, 1.442695
        %v1414 = vpow.pop %v1413
        %v1415 = vmul.f32 %v1409, 1.442695
        %v1416 = vpow.pop %v1415
        %v1417 = vmul.f32 %v1410, 1.442695
        %v1418 = vpow.pop %v1417
        %v1419 = vadd.f32 %v1412, 1.0
        %v1420 = vadd.f32 %v1414, 1.0
        %v1421 = vadd.f32 %v1416, 1.0
        %v1422 = vadd.f32 %v1418, 1.0
        %v1423 = vrcp.pop %v1419
        %v1424 = vmul.f32 1.0, %v1423
        %v1425 = vrcp.pop %v1420
        %v1426 = vmul.f32 1.0, %v1425
        %v1427 = vrcp.pop %v1421
        %v1428 = vmul.f32 1.0, %v1427
        %v1429 = vrcp.pop %v1422
        %v1430 = vmul.f32 1.0, %v1429
        %1431 = vst [vmem:[%s280] sm:$0xff] %v1424
        %1432 = vst [vmem:[%s280 + $0x8] sm:$0xff] %v1426
        %1433 = vst [vmem:[%s280 + $0x10] sm:$0xff] %v1428
        %1434 = vst [vmem:[%s280 + $0x18] sm:$0xff] %v1430
        %s1435 = sand.u32 %s144, 1
        %s1436 = scalar_lea.sflag [#allocation4], %s1435
        %s1437 = sand.u32 %s144, 1
        %s1438 = smul.addr %s1437, 32
        %s1439 = scalar_lea.vmem [#allocation8], %s1438
        // Predicated region
        $region53: #{tpu_custom_call.1} parent=39 // pred_check
          %p1440 = pneg %p154
        $region54: #{tpu_custom_call.1} parent=39 // pred_check_branch
          %1442 = sbr.rel (%p1440) target = $region56
        $region55: #{tpu_custom_call.1} parent=39 // pred_region
          %s1443 = smul.u32 4, %s21
          %s1445 = ssub.s32 512, 512
          %1446 = vsyncadd %s1436, %s1445
          %s1447 = smul.addr %s1443, 128
          %s1448 = scalar_lea.hbm %s5, %s1447
          %s1450 = sshll.u32 %s1439, 4
          %s1451 = int_to_ptr.vmem [resolvable:$true] %s1450
          %1453 = dma.vmem_to_hbm [thread:$0]  %s1451, 512, %s1448, %s1436
        $region56: #{tpu_custom_call.1} parent=39 // pred_fallthru
          _
      $region40: #{tpu_custom_call.1} parent=5 // pred_fallthru
        _
      %p1454 = scmp.le.s32.totalorder 2, %s16
      // Predicated region
      $region57: #{tpu_custom_call.1} parent=5 // pred_check
        %p1455 = pneg %p1454
      $region58: #{tpu_custom_call.1} parent=5 // pred_check_branch
        %1457 = sbr.rel (%p1455) target = $region60
      $region59: #{tpu_custom_call.1} parent=5 // pred_region
        %s1458 = ssub.s32 %s16, 2
        // Predicated region
        $region61: #{tpu_custom_call.1} parent=59 // pred_check
          %p1459 = pneg %p160
        $region62: #{tpu_custom_call.1} parent=59 // pred_check_branch
          %1461 = sbr.rel (%p1459) target = $region64
        $region63: #{tpu_custom_call.1} parent=59 // pred_region
          %s1462 = sand.u32 %s145, 1
          %s1463 = scalar_lea.sflag [#allocation4], %s1462
          %s1464 = sand.u32 %s145, 1
          %s1465 = smul.addr %s1464, 32
          %s1466 = scalar_lea.vmem [#allocation8], %s1465
          %1467 = dma.done %s1463, 512
        $region64: #{tpu_custom_call.1} parent=59 // pred_fallthru
          _
      $region60: #{tpu_custom_call.1} parent=5 // pred_fallthru
        _
    $region6: #{tpu_custom_call.1} parent=1 // loop_footer
      %s20 = sadd.s32 1, %s16
    $region7: #{tpu_custom_call.1} parent=1 // loop_footer_branch
      %15 = sbr.rel target = $region3
    $region8: #{tpu_custom_call.1} parent=1 // loop_exit
      _
    %1468 = vsyncpa [#allocation3], 1
    %s1469 = scalar_lea.sflag [#allocation3], 1
    %1470 = vsyncpa %s1469, 1
    %1471 = vsyncpa [#allocation6], 1
    %1472 = vsyncpa [#allocation4], 1
    %s1473 = scalar_lea.sflag [#allocation4], 1
    %1474 = vsyncpa %s1473, 1

</llo_original>
